<compile_context>
chip_gen: v7x
topology: tpu7x:2x2x1
jax: 0.10.0
libtpu: 0.0.40
codegen_flags: <defaults>
</compile_context>

<pallas_src>
import jax
import jax.numpy as jnp
from jax.experimental import pallas as pl
from jax.experimental.pallas import tpu as pltpu

N_COPIES = 10
IN_FEATURES = 10          # Linear in_features
OUT_FEATURES = 5          # Linear out_features


def _cat_linear_kernel(x_ref, w_ref, b_ref, o_ref):
    # VPU-only broadcast-FMA: out = b + sum_f x[:, f] * w[f, :].
    # F is tiny (== 1 here), so an unrolled multiply-accumulate beats a K<=10
    # MXU matmul (which would waste >90% of the systolic array) on every chip.
    x = x_ref[...].astype(jnp.float32)          # (tb, F)
    w = w_ref[...].astype(jnp.float32)          # (F, OUT)
    out = b_ref[...].astype(jnp.float32)        # (1, OUT) -> broadcasts to (tb, OUT)
    for f in range(x_ref.shape[1]):             # static unroll over F
        out = out + x[:, f:f + 1] * w[f:f + 1, :]
    o_ref[...] = out.astype(o_ref.dtype)


def fold_weights(w, b):
    """Fold the 10-way concat into the weight (exact):
       cat([x]*10) @ W.T == x @ (sum_c W[:, c*F:(c+1)*F]).T
    Returns (w_eff_t: (F, OUT) f32, b_2d: (1, OUT) f32). Call once / hoist."""
    out_f, in_f = w.shape
    assert in_f % N_COPIES == 0, "in_features must be divisible by the copy count"
    F = in_f // N_COPIES
    w_eff = w.reshape(out_f, N_COPIES, F).sum(axis=1)        # (OUT, F)
    w_eff_t = w_eff.T.astype(jnp.float32)                    # (F, OUT)
    b_2d = b.reshape(1, out_f).astype(jnp.float32)           # (1, OUT)
    return w_eff_t, b_2d


def _pick_batch_tile(B, max_tile=4096):
    if B <= max_tile:
        return B                      # single full-extent block (always legal)
    # Large B: >= 2 grid steps (v7x megacore sharding), sublane-aligned tile;
    # any ragged tail is handled by the cdiv grid with masked edge blocks.
    tb = min(max_tile, -(-B // 2))
    return max(8, (tb // 8) * 8)


def cat_linear_pallas(x, w_eff_t, b_2d, *, max_batch_tile=4096):
    """Pallas path: y = x @ w_eff_t + b, output written directly as (B, OUT)."""
    B, F = x.shape
    assert w_eff_t.shape[0] == F
    OUT = w_eff_t.shape[1]

    tb = _pick_batch_tile(B, max_batch_tile)
    grid = (pl.cdiv(B, tb),)

    return pl.pallas_call(
        _cat_linear_kernel,
        out_shape=jax.ShapeDtypeStruct((B, OUT), jnp.float32),
        grid=grid,
        in_specs=[
            pl.BlockSpec((tb, F), lambda i: (i, 0)),       # x tile (cast in kernel)
            pl.BlockSpec((F, OUT), lambda i: (0, 0)),      # folded, transposed W
            pl.BlockSpec((1, OUT), lambda i: (0, 0)),      # bias row
        ],
        out_specs=pl.BlockSpec((tb, OUT), lambda i: (i, 0)),
        compiler_params=pltpu.CompilerParams(
            dimension_semantics=("parallel",)),
    )(x, w_eff_t, b_2d)


def cat_linear(x, w, b, *, min_pallas_batch=1024, max_batch_tile=4096):
    """Forward of the module. Tiny B -> plain XLA fusion (pallas_call launch
    overhead would dwarf the ~10 FLOPs); large B -> Pallas kernel."""
    w_eff_t, b_2d = fold_weights(w, b)
    if x.shape[0] < min_pallas_batch:
        return jnp.dot(x.astype(jnp.float32), w_eff_t) + b_2d
    return cat_linear_pallas(x, w_eff_t, b_2d, max_batch_tile=max_batch_tile)


if __name__ == "__main__":
    key = jax.random.PRNGKey(0)
    kx, kw, kb, kx2 = jax.random.split(key, 4)

    # x: (2, 1) so the 10-way concat yields (2, 10) == Linear(10, 5) in_features.
    B, F = 2, 1
    x = jax.random.normal(kx, (B, F), dtype=jnp.float32)

    # PyTorch-like Linear init: U(-1/sqrt(in_features), 1/sqrt(in_features)).
    bound = 1.0 / (IN_FEATURES ** 0.5)
    w = jax.random.uniform(kw, (OUT_FEATURES, IN_FEATURES), jnp.float32, -bound, bound)
    b = jax.random.uniform(kb, (OUT_FEATURES,), jnp.float32, -bound, bound)

    # Pure-JAX reference of the original forward (explicit concat + Linear).
    def ref_fn(xx):
        return jnp.concatenate([xx] * N_COPIES, axis=1) @ w.T + b

    w_eff_t, b_2d = fold_weights(w, b)   # hoisted: folded once, reused below

    # 1) Module-shape input through the Pallas kernel (single block, grid=(1,)).
    out_small = cat_linear_pallas(x, w_eff_t, b_2d)
    jax.block_until_ready(out_small)
    assert out_small.shape == (B, OUT_FEATURES)
    assert jnp.allclose(out_small, ref_fn(x), atol=1e-5, rtol=1e-5)

    # 2) Larger batch with a small tile to exercise the multi-step parallel grid.
    B2 = 1024
    x2 = jax.random.normal(kx2, (B2, F), dtype=jnp.float32)
    out_big = cat_linear_pallas(x2, w_eff_t, b_2d, max_batch_tile=256)
    jax.block_until_ready(out_big)
    assert out_big.shape == (B2, OUT_FEATURES)
    assert jnp.allclose(out_big, ref_fn(x2), atol=1e-5, rtol=1e-5)

    # 3) Default dispatcher: tiny B stays on the plain XLA fusion fast path.
    out_disp = cat_linear(x, w, b)
    jax.block_until_ready(out_disp)
    assert jnp.allclose(out_disp, ref_fn(x), atol=1e-5, rtol=1e-5)

    print("KERNEL_OK")
</pallas_src>

<mosaic_0001>
module attributes {stable_mosaic.version = 11 : i64} {
  func.func @_cat_linear_kernel(%arg0: i32, %arg1: memref<2x1xf32, #tpu.memory_space<vmem>>, %arg2: memref<1x5xf32, #tpu.memory_space<vmem>>, %arg3: memref<1x5xf32, #tpu.memory_space<vmem>>, %arg4: memref<2x5xf32, #tpu.memory_space<vmem>>) attributes {dimension_semantics = [#tpu.dimension_semantics<parallel>], iteration_bounds = array<i64: 1>, scalar_prefetch = 0 : i64, scratch_operands = 0 : i64, tpu.core_type = #tpu.core_type<tc>, window_params = [{transform_indices = @transform_0, window_bounds = array<i64: 2, 1>}, {pipeline_mode = #tpu.pipeline_mode<synchronous>, transform_indices = @transform_1, window_bounds = array<i64: 1, 5>}, {pipeline_mode = #tpu.pipeline_mode<synchronous>, transform_indices = @transform_2, window_bounds = array<i64: 1, 5>}, {transform_indices = @transform_3, window_bounds = array<i64: 2, 5>}]} {
    %c0 = arith.constant 0 : index
    %c0_0 = arith.constant 0 : index
    %0 = vector.load %arg1[%c0, %c0_0] : memref<2x1xf32, #tpu.memory_space<vmem>>, vector<2x1xf32>
    %c0_1 = arith.constant 0 : index
    %c0_2 = arith.constant 0 : index
    %1 = vector.load %arg2[%c0_1, %c0_2] : memref<1x5xf32, #tpu.memory_space<vmem>>, vector<1x5xf32>
    %c0_3 = arith.constant 0 : index
    %c0_4 = arith.constant 0 : index
    %2 = vector.load %arg3[%c0_3, %c0_4] : memref<1x5xf32, #tpu.memory_space<vmem>>, vector<1x5xf32>
    %3 = vector.broadcast %0 : vector<2x1xf32> to vector<2x5xf32>
    %4 = vector.broadcast %1 : vector<1x5xf32> to vector<2x5xf32>
    %5 = arith.mulf %3, %4 : vector<2x5xf32>
    %6 = vector.broadcast %2 : vector<1x5xf32> to vector<2x5xf32>
    %7 = arith.addf %6, %5 : vector<2x5xf32>
    %c0_5 = arith.constant 0 : index
    %c0_6 = arith.constant 0 : index
    %8 = vector.load %arg4[%c0_5, %c0_6] : memref<2x5xf32, #tpu.memory_space<vmem>>, vector<2x5xf32>
    tpu.vector_store %arg4[%c0_5, %c0_6], %7 {strides = array<i32>} : memref<2x5xf32, #tpu.memory_space<vmem>>, vector<2x5xf32>,
    return
  }
  func.func @transform_0(%arg0: i32) -> (i32, i32) {
    %c0_i32 = arith.constant 0 : i32
    %c0_i32_0 = arith.constant 0 : i32
    return %arg0, %c0_i32 : i32, i32
  }
  func.func @transform_1(%arg0: i32) -> (i32, i32) {
    %c0_i32 = arith.constant 0 : i32
    %c0_i32_0 = arith.constant 0 : i32
    %c0_i32_1 = arith.constant 0 : i32
    return %c0_i32, %c0_i32_0 : i32, i32
  }
  func.func @transform_2(%arg0: i32) -> (i32, i32) {
    %c0_i32 = arith.constant 0 : i32
    %c0_i32_0 = arith.constant 0 : i32
    %c0_i32_1 = arith.constant 0 : i32
    return %c0_i32, %c0_i32_0 : i32, i32
  }
  func.func @transform_3(%arg0: i32) -> (i32, i32) {
    %c0_i32 = arith.constant 0 : i32
    %c0_i32_0 = arith.constant 0 : i32
    return %arg0, %c0_i32 : i32, i32
  }
}

</mosaic_0001>

<llo_original>
// kernel: tpu_custom_call.1
$region0: #{tpu_custom_call.1}
  #allocation0 [shape = 'u32[]', space=smem, size = 0x4, offset = 0x4, fixed_abs, tag = 'smem constant byte address 0x4 - core index']
  #allocation1 [shape = 'u32[144,128]{1,0:T(1,128)}', space=vmem, size = 0x12000, scoped, tag = 'internal scratch']
  %s0 = inlined_call_operand.vmem [shape: f32[2,1], index: 0, kind: input, shape index: {}]
  %s1 = inlined_call_operand.vmem [shape: f32[1,5], index: 1, kind: input, shape index: {}]
  %s2 = inlined_call_operand.vmem [shape: f32[1,5], index: 2, kind: input, shape index: {}]
  %s3 = inlined_call_operand.hbm [shape: f32[2,5], index: 3, kind: output, shape index: {}]
  %s4 = sld [smem:[#allocation0]]
  $region22: #{tpu_custom_call.1} parent=0
    _
  %s6 = ssub.s32 1, %s4
  %s7 = scalar_select 0, %s6, %s4
  $region1: #{tpu_custom_call.1} parent=0
    #allocation2 [shape = 'u8[1024]{0}', space=vmem, size = 0x400, scoped, tag = 'output window, operand 0, single buffered']
    #allocation3 [shape = 's32[1]{0}', space=sflag, size = 0x4, scoped, tag = 'scoped memory for tpu_custom_call.1']
    %8 = vsyncpa [#allocation3], 0
    // Predicated region
    $region2: #{tpu_custom_call.1} parent=1 // pred_check
      _
    $region3: #{tpu_custom_call.1} parent=1 // pred_check_branch
      %10 = sbr.rel (0) target = $region5
    $region4: #{tpu_custom_call.1} parent=1 // pred_region
      _
    $region5: #{tpu_custom_call.1} parent=1 // pred_fallthru
      _
    // Predicated region
    $region6: #{tpu_custom_call.1} parent=1 // pred_check
      _
    $region7: #{tpu_custom_call.1} parent=1 // pred_check_branch
      %12 = sbr.rel (0) target = $region9
    $region8: #{tpu_custom_call.1} parent=1 // pred_region
      _
    $region9: #{tpu_custom_call.1} parent=1 // pred_fallthru
      _
    // Predicated region
    $region10: #{tpu_custom_call.1} parent=1 // pred_check
      _
    $region11: #{tpu_custom_call.1} parent=1 // pred_check_branch
      %14 = sbr.rel (0) target = $region13
    $region12: #{tpu_custom_call.1} parent=1 // pred_region
      _
    $region13: #{tpu_custom_call.1} parent=1 // pred_fallthru
      _
    %v15 = vld [vmem:[%s0] sm:$0x3]
    %v16 = vld [vmem:[%s1] sm:$0x1]
    %v17 = vld [vmem:[%s2] sm:$0x1]
    %19 = vset.pattern.permute.xlu0 0
    %20 = vperm.xlu0 %19, %v15
    %v21 = vpop.permute.xlu0 %20
    %v24 = vlaneseq
    %v25 = vshrl.u32 %v24, 7
    %v26 = vsub.s32 0, %v25
    %v27 = vrot.slane %v16, %v26
    %v29 = vmul.f32 %v21, %v27
    %v31 = vlaneseq
    %v32 = vshrl.u32 %v31, 7
    %v33 = vsub.s32 0, %v32
    %v34 = vrot.slane %v17, %v33
    %v36 = vadd.f32 %v34, %v29
    %vm37 = vcmask 33792
    %38 = vst.msk [vmem:[#allocation2] sm:$0x3] %vm37, %v36
    // Predicated region
    $region14: #{tpu_custom_call.1} parent=1 // pred_check
      _
    $region15: #{tpu_custom_call.1} parent=1 // pred_check_branch
      %40 = sbr.rel (0) target = $region17
    $region16: #{tpu_custom_call.1} parent=1 // pred_region
      %s42 = ssub.s32 32, 32
      %43 = vsyncadd [#allocation3], %s42
      %s45 = sshll.u32 [#allocation2], 4
      %s46 = int_to_ptr.vmem [resolvable:$true] %s45
      %48 = dma.vmem_to_hbm [thread:$0]  %s46, 32, %s3, [#allocation3]
    $region17: #{tpu_custom_call.1} parent=1 // pred_fallthru
      _
    // Predicated region
    $region18: #{tpu_custom_call.1} parent=1 // pred_check
      _
    $region19: #{tpu_custom_call.1} parent=1 // pred_check_branch
      %50 = sbr.rel (0) target = $region21
    $region20: #{tpu_custom_call.1} parent=1 // pred_region
      %51 = dma.done [#allocation3], 32
    $region21: #{tpu_custom_call.1} parent=1 // pred_fallthru
      _
    %52 = vsyncpa [#allocation3], 1

</llo_original>
